<compile_context>
chip_gen: v7x
topology: tpu7x:2x2x1
jax: 0.10.0
libtpu: 0.0.40
codegen_flags: <defaults>
</compile_context>

<pallas_src>
import numpy as np
import jax
import jax.numpy as jnp
from jax.experimental import pallas as pl
from jax.experimental.pallas import tpu as pltpu  # noqa: F401  (kept for TPU backend clarity)

# ---------------- module hyper-parameters (EquiLLM defaults) ----------------
VOCAB_SIZE = 8
GROUP_SIZE = 2
EQ_WORD_INDICES = [2, 7]
SEQ_LEN = 8
HIDDEN = 32
VOCAB_PAD = 128          # lane-dense padded vocab width for the kernel output


# ---------------- group utilities (mirror EquiNLG helpers) ----------------
def cyclic_group_generator(vocab_size, group_size, eq_indices):
    g = {i: i for i in range(vocab_size)}
    n = len(eq_indices)
    for j, idx in enumerate(eq_indices):
        g[idx] = eq_indices[(j + 1) % n]
    return g


def cyclic_group(g, vocab_size, group_size):
    G = [{i: i for i in range(vocab_size)}]          # identity
    for _ in range(group_size - 1):
        prev = G[-1]
        G.append({i: g[prev[i]] for i in range(vocab_size)})
    return G


def group_perm_array(vocab_size, group_size, eq_indices):
    gen = cyclic_group_generator(vocab_size, group_size, eq_indices)
    G = cyclic_group(gen, vocab_size, group_size)
    return np.asarray([[gd[i] for i in range(vocab_size)] for gd in G],
                      dtype=np.int32)               # (GROUP, VOCAB)


# ---------------- Pallas kernel (single invocation, no grid) ----------------
def _equi_llm_kernel(x_ref, w1_ref, b1_ref, w2_ref, out_ref):
    """Fused EquiLLM forward for ALL group elements at once.

    x_ref  : (S, G*H)    group-transformed embedded contexts, group stacked on
                         the contraction axis
    w1_ref : (G*H, G*H)  block-diagonal W1 (one identical block per group elem)
    b1_ref : (1, G*H)    tiled b1
    w2_ref : (G*H, VP)   stacked (W2 @ P_g) / G, vocab padded to 128 lanes
                         (permutation scatter + group mean folded in)
    out_ref: (S, VP)     group-mean logits (vocab-padded), lane-dense store
    """
    h = jnp.tanh(
        jnp.dot(x_ref[...], w1_ref[...], preferred_element_type=jnp.float32)
        + b1_ref[...])                                               # (S, G*H)
    out_ref[...] = jnp.dot(h, w2_ref[...],
                           preferred_element_type=jnp.float32)       # (S, VP)


# ---------------- wrapper ----------------
def equi_llm_forward(input_ids, params, perms, labels=None):
    """input_ids: (1, S) int32 token ids. Returns [loss, logits(S, V)]."""
    G, V = perms.shape
    S = input_ids.shape[1]
    H = params["w1"].shape[0]
    GH = G * H
    VP = max(VOCAB_PAD, V)

    # ---- glue: g_transform_data + pre_model embedding lookup ----------------
    transformed_ids = perms[:, input_ids[0]]                        # (G, S)
    x_emb = (params["wte"][transformed_ids]
             + params["wpe"][None, :S, :]).astype(jnp.float32)      # (G, S, H)
    # group element on the contraction axis -> (S, G*H)
    x_flat = jnp.transpose(x_emb, (1, 0, 2)).reshape(S, GH)

    # Block-diagonal W1 + tiled b1: one pre_model MLP per group element,
    # evaluated by a single (S, G*H) @ (G*H, G*H) matmul.
    w1_blk = jnp.kron(jnp.eye(G, dtype=jnp.float32), params["w1"])  # (GH, GH)
    b1_tiled = jnp.tile(params["b1"], (1, G))                       # (1, GH)

    # Fold g_inv_transform (logits @ P_g) and the 1/G group mean into W2:
    #   out = (1/G) * sum_g h_g @ (W2 @ P_g)  + mean_g(b2 @ P_g)
    P = jax.nn.one_hot(perms, V, dtype=jnp.float32)                 # (G, V, V)
    w2_g = jnp.einsum("hv,gvw->ghw", params["w2"], P)               # (G, H, V)
    w2_stack = w2_g.reshape(GH, V) * (1.0 / G)                      # (GH, V)
    w2_pad = jnp.zeros((GH, VP), jnp.float32).at[:, :V].set(w2_stack)
    b2_mean = jnp.mean(jnp.einsum("ov,gvw->gow", params["b2"], P),
                       axis=0)                                      # (1, V)

    out_padded = pl.pallas_call(
        _equi_llm_kernel,
        out_shape=jax.ShapeDtypeStruct((S, VP), jnp.float32),
    )(x_flat, w1_blk, b1_tiled, w2_pad)

    # Bias is a group-mean constant -> hoisted out of the kernel; slice off the
    # lane padding.
    logits = out_padded[:, :V] + b2_mean                            # (S, V)

    # TODO(synk): CrossEntropyLoss branch (labels is not None) left as plain-JAX
    # glue; default forward path uses labels=None -> loss = 0, matching PyTorch.
    loss = 0.0
    return [loss, logits]


# ---------------- pure-JAX reference (for correctness check) ----------------
def equi_llm_reference(input_ids, params, perms):
    transformed_ids = perms[:, input_ids[0]]                        # (G, S)
    x_emb = params["wte"][transformed_ids] + params["wpe"][None, :, :]
    h = jnp.tanh(jnp.einsum("gsh,hk->gsk", x_emb, params["w1"]) + params["b1"])
    logits = jnp.einsum("gsh,hv->gsv", h, params["w2"]) + params["b2"]
    P = jax.nn.one_hot(perms, perms.shape[1], dtype=jnp.float32)
    group_logits = jnp.einsum("gsv,gvw->gsw", logits, P)
    return jnp.mean(group_logits, axis=0)


# ---------------- parameter init + driver ----------------
def init_params(key):
    k = jax.random.split(key, 6)
    return {
        "wte": 0.1 * jax.random.normal(k[0], (VOCAB_SIZE, HIDDEN), jnp.float32),
        "wpe": 0.1 * jax.random.normal(k[1], (SEQ_LEN, HIDDEN), jnp.float32),
        "w1": 0.1 * jax.random.normal(k[2], (HIDDEN, HIDDEN), jnp.float32),
        "b1": 0.1 * jax.random.normal(k[3], (1, HIDDEN), jnp.float32),
        "w2": 0.1 * jax.random.normal(k[4], (HIDDEN, VOCAB_SIZE), jnp.float32),
        "b2": 0.1 * jax.random.normal(k[5], (1, VOCAB_SIZE), jnp.float32),
    }


if __name__ == "__main__":
    key = jax.random.PRNGKey(0)
    pkey, ikey = jax.random.split(key)
    params = init_params(pkey)

    input_ids = jax.random.randint(ikey, (1, SEQ_LEN), 0, VOCAB_SIZE, jnp.int32)
    perms = jnp.asarray(group_perm_array(VOCAB_SIZE, GROUP_SIZE, EQ_WORD_INDICES))

    loss, logits = equi_llm_forward(input_ids, params, perms)
    logits = jax.block_until_ready(logits)

    ref = jax.block_until_ready(equi_llm_reference(input_ids, params, perms))
    assert logits.shape == (SEQ_LEN, VOCAB_SIZE)
    np.testing.assert_allclose(np.asarray(logits), np.asarray(ref),
                               rtol=1e-5, atol=1e-5)
    print("KERNEL_OK")
</pallas_src>

<mosaic_0001>
module attributes {stable_mosaic.version = 11 : i64} {
  func.func @_equi_llm_kernel(%arg0: memref<8x64xf32, #tpu.memory_space<vmem>>, %arg1: memref<64x64xf32, #tpu.memory_space<vmem>>, %arg2: memref<1x64xf32, #tpu.memory_space<vmem>>, %arg3: memref<64x128xf32, #tpu.memory_space<vmem>>, %arg4: memref<8x128xf32, #tpu.memory_space<vmem>>) attributes {dimension_semantics = [], scalar_prefetch = 0 : i64, scratch_operands = 0 : i64, tpu.core_type = #tpu.core_type<tc>} {
    %c0 = arith.constant 0 : index
    %c0_0 = arith.constant 0 : index
    %0 = vector.load %arg0[%c0, %c0_0] : memref<8x64xf32, #tpu.memory_space<vmem>>, vector<8x64xf32>
    %c0_1 = arith.constant 0 : index
    %c0_2 = arith.constant 0 : index
    %1 = vector.load %arg1[%c0_1, %c0_2] : memref<64x64xf32, #tpu.memory_space<vmem>>, vector<64x64xf32>
    %cst = arith.constant dense<0.000000e+00> : vector<8x64xf32>
    %2 = tpu.matmul %0, %1, %cst {dimension_numbers = #tpu.dot_dimension_numbers<[1], [0], [0], [1], [0, 0, 1, 1], [], []>} : vector<8x64xf32>, vector<64x64xf32>, vector<8x64xf32> -> vector<8x64xf32>
    %c0_3 = arith.constant 0 : index
    %c0_4 = arith.constant 0 : index
    %3 = vector.load %arg2[%c0_3, %c0_4] : memref<1x64xf32, #tpu.memory_space<vmem>>, vector<1x64xf32>
    %4 = vector.broadcast %3 : vector<1x64xf32> to vector<8x64xf32>
    %5 = arith.addf %2, %4 : vector<8x64xf32>
    %6 = math.tanh %5 : vector<8x64xf32>
    %c0_5 = arith.constant 0 : index
    %c0_6 = arith.constant 0 : index
    %7 = vector.load %arg3[%c0_5, %c0_6] : memref<64x128xf32, #tpu.memory_space<vmem>>, vector<64x128xf32>
    %cst_7 = arith.constant dense<0.000000e+00> : vector<8x128xf32>
    %8 = tpu.matmul %6, %7, %cst_7 {dimension_numbers = #tpu.dot_dimension_numbers<[1], [0], [0], [1], [0, 0, 1, 1], [], []>} : vector<8x64xf32>, vector<64x128xf32>, vector<8x128xf32> -> vector<8x128xf32>
    %c0_8 = arith.constant 0 : index
    %c0_9 = arith.constant 0 : index
    %9 = vector.load %arg4[%c0_8, %c0_9] : memref<8x128xf32, #tpu.memory_space<vmem>>, vector<8x128xf32>
    tpu.vector_store %arg4[%c0_8, %c0_9], %8 {strides = array<i32>} : memref<8x128xf32, #tpu.memory_space<vmem>>, vector<8x128xf32>,
    return
  }
}

</mosaic_0001>

<llo_original>
// kernel: tpu_custom_call.1
$region0: #{tpu_custom_call.1}
  #allocation0 [shape = 'u32[]', space=smem, size = 0x4, offset = 0x4, fixed_abs, tag = 'smem constant byte address 0x4 - core index']
  #allocation1 [shape = 'u32[144,128]{1,0:T(1,128)}', space=vmem, size = 0x12000, scoped, tag = 'internal scratch']
  %s0 = inlined_call_operand.hbm [shape: f32[8,64], index: 0, kind: input, shape index: {}]
  %s1 = inlined_call_operand.hbm [shape: f32[64,64], index: 1, kind: input, shape index: {}]
  %s2 = inlined_call_operand.vmem [shape: f32[1,64], index: 2, kind: input, shape index: {}]
  %s3 = inlined_call_operand.hbm [shape: f32[64,128], index: 3, kind: input, shape index: {}]
  %s4 = inlined_call_operand.hbm [shape: f32[8,128], index: 4, kind: output, shape index: {}]
  %s5 = sld [smem:[#allocation0]]
  $region38: #{tpu_custom_call.1} parent=0
    _
  %s7 = ssub.s32 1, %s5
  %s8 = scalar_select 0, %s7, %s5
  $region1: #{tpu_custom_call.1} parent=0
    #allocation2 [shape = 'u8[4096]{0}', space=vmem, size = 0x1000, scoped, tag = 'input window, operand 0, single buffered']
    #allocation3 [shape = 's32[1]{0}', space=sflag, size = 0x4, scoped, tag = 'scoped memory for tpu_custom_call.1']
    #allocation4 [shape = 's32[1]{0}', space=sflag, size = 0x4, scoped, tag = 'scoped memory for tpu_custom_call.1']
    #allocation5 [shape = 'u8[32768]{0}', space=vmem, size = 0x8000, scoped, tag = 'input window, operand 1, single buffered']
    #allocation6 [shape = 's32[1]{0}', space=sflag, size = 0x4, scoped, tag = 'scoped memory for tpu_custom_call.1']
    #allocation7 [shape = 'u8[32768]{0}', space=vmem, size = 0x8000, scoped, tag = 'input window, operand 3, single buffered']
    #allocation8 [shape = 'u8[4096]{0}', space=vmem, size = 0x1000, scoped, tag = 'output window, operand 0, single buffered']
    %9 = vsyncpa [#allocation3], 0
    %10 = vsyncpa [#allocation6], 0
    %11 = vsyncpa [#allocation4], 0
    // Predicated region
    $region2: #{tpu_custom_call.1} parent=1 // pred_check
      _
    $region3: #{tpu_custom_call.1} parent=1 // pred_check_branch
      %13 = sbr.rel (0) target = $region5
    $region4: #{tpu_custom_call.1} parent=1 // pred_region
      %s15 = ssub.s32 128, 128
      %16 = vsyncadd [#allocation3], %s15
      %s18 = sshll.u32 [#allocation2], 4
      %s19 = int_to_ptr.vmem [resolvable:$true] %s18
      %21 = dma.hbm_to_vmem [thread:$0]  %s0, 128, %s19, [#allocation3]
    $region5: #{tpu_custom_call.1} parent=1 // pred_fallthru
      _
    // Predicated region
    $region6: #{tpu_custom_call.1} parent=1 // pred_check
      _
    $region7: #{tpu_custom_call.1} parent=1 // pred_check_branch
      %23 = sbr.rel (0) target = $region9
    $region8: #{tpu_custom_call.1} parent=1 // pred_region
      %s25 = ssub.s32 1024, 1024
      %26 = vsyncadd [#allocation6], %s25
      %s27 = sshll.u32 [#allocation5], 4
      %s28 = int_to_ptr.vmem [resolvable:$true] %s27
      %33 = dma.hbm_to_vmem [thread:$0]  %s1, 1024, %s28, [#allocation6], 128, 128, 8
    $region9: #{tpu_custom_call.1} parent=1 // pred_fallthru
      _
    // Predicated region
    $region10: #{tpu_custom_call.1} parent=1 // pred_check
      _
    $region11: #{tpu_custom_call.1} parent=1 // pred_check_branch
      %35 = sbr.rel (0) target = $region13
    $region12: #{tpu_custom_call.1} parent=1 // pred_region
      _
    $region13: #{tpu_custom_call.1} parent=1 // pred_fallthru
      _
    // Predicated region
    $region14: #{tpu_custom_call.1} parent=1 // pred_check
      _
    $region15: #{tpu_custom_call.1} parent=1 // pred_check_branch
      %37 = sbr.rel (0) target = $region17
    $region16: #{tpu_custom_call.1} parent=1 // pred_region
      %s39 = ssub.s32 1024, 1024
      %40 = vsyncadd [#allocation6], %s39
      %s41 = sshll.u32 [#allocation7], 4
      %s42 = int_to_ptr.vmem [resolvable:$true] %s41
      %47 = dma.hbm_to_vmem [thread:$0]  %s3, 1024, %s42, [#allocation6], 128, 128, 8
    $region17: #{tpu_custom_call.1} parent=1 // pred_fallthru
      _
    // Predicated region
    $region18: #{tpu_custom_call.1} parent=1 // pred_check
      _
    $region19: #{tpu_custom_call.1} parent=1 // pred_check_branch
      %49 = sbr.rel (0) target = $region21
    $region20: #{tpu_custom_call.1} parent=1 // pred_region
      %50 = dma.done [#allocation3], 128
    $region21: #{tpu_custom_call.1} parent=1 // pred_fallthru
      _
    // Predicated region
    $region22: #{tpu_custom_call.1} parent=1 // pred_check
      _
    $region23: #{tpu_custom_call.1} parent=1 // pred_check_branch
      %52 = sbr.rel (0) target = $region25
    $region24: #{tpu_custom_call.1} parent=1 // pred_region
      %53 = dma.done [#allocation6], 1024
    $region25: #{tpu_custom_call.1} parent=1 // pred_fallthru
      _
    // Predicated region
    $region26: #{tpu_custom_call.1} parent=1 // pred_check
      _
    $region27: #{tpu_custom_call.1} parent=1 // pred_check_branch
      %55 = sbr.rel (0) target = $region29
    $region28: #{tpu_custom_call.1} parent=1 // pred_region
      %56 = dma.done [#allocation6], 1024
    $region29: #{tpu_custom_call.1} parent=1 // pred_fallthru
      _
    %v57 = vld [vmem:[#allocation2] sm:$0xff]
    %v58 = vld [vmem:[#allocation5] sm:$0xff]
    %v59 = vld [vmem:[#allocation5 + $0x8] sm:$0xff]
    %v60 = vld [vmem:[#allocation5 + $0x10] sm:$0xff]
    %v61 = vld [vmem:[#allocation5 + $0x18] sm:$0xff]
    %v62 = vld [vmem:[#allocation5 + $0x20] sm:$0xff]
    %v63 = vld [vmem:[#allocation5 + $0x28] sm:$0xff]
    %v64 = vld [vmem:[#allocation5 + $0x30] sm:$0xff]
    %v65 = vld [vmem:[#allocation5 + $0x38] sm:$0xff]
    %v66 = vld [vmem:[%s2] sm:$0x1]
    %v68 = vlaneseq
    %v69 = vshrl.u32 %v68, 7
    %v70 = vsub.s32 0, %v69
    %v71 = vrot.slane %v66, %v70
    %vm73 = vcmask 523264
    %v75 = vsel %vm73, %v57, 0
    %77 = vmatprep.subr.mxu0 0.0
    %78 = vmatpush1.msra.mxu0 %v58
    %79 = vmatprep.subr.mxu0 0.0
    %80 = vmatpush1.msra.mxu0 %v59
    %81 = vmatprep.subr.mxu0 0.0
    %82 = vmatpush1.msra.mxu0 %v60
    %83 = vmatprep.subr.mxu0 0.0
    %84 = vmatpush1.msra.mxu0 %v61
    %85 = vmatprep.subr.mxu0 0.0
    %86 = vmatpush1.msra.mxu0 %v62
    %87 = vmatprep.subr.mxu0 0.0
    %88 = vmatpush1.msra.mxu0 %v63
    %89 = vmatprep.subr.mxu0 0.0
    %90 = vmatpush1.msra.mxu0 %v64
    %91 = vmatprep.subr.mxu0 0.0
    %92 = vmatpush1.msra.mxu0 %v65
    %93 = vmatprep.subr.mxu0 0.0
    %94 = vmatpush1.msra.mxu0 0.0
    %95 = vmatprep.subr.mxu0 0.0
    %96 = vmatpush1.msra.mxu0 0.0
    %97 = vmatprep.subr.mxu0 0.0
    %98 = vmatpush1.msra.mxu0 0.0
    %99 = vmatprep.subr.mxu0 0.0
    %100 = vmatpush1.msra.mxu0 0.0
    %101 = vmatprep.subr.mxu0 0.0
    %102 = vmatpush1.msra.mxu0 0.0
    %103 = vmatprep.subr.mxu0 0.0
    %104 = vmatpush1.msra.mxu0 0.0
    %105 = vmatprep.subr.mxu0 0.0
    %106 = vmatpush1.msra.mxu0 0.0
    %107 = vmatprep.subr.mxu0 0.0
    %108 = vmatpush1.msra.mxu0 0.0
    %109 = vmatprep.subr.mxu0 0.0
    %110 = vmatpush1.msra.mxu0 0.0
    %111 = vmatprep.subr.mxu0 0.0
    %112 = vmatpush1.msra.mxu0 0.0
    %113 = vmatprep.subr.mxu0 0.0
    %114 = vmatpush1.msra.mxu0 0.0
    %115 = vmatprep.subr.mxu0 0.0
    %116 = vmatpush1.msra.mxu0 0.0
    %117 = vmatprep.subr.mxu0 0.0
    %118 = vmatpush1.msra.mxu0 0.0
    %119 = vmatprep.subr.mxu0 0.0
    %120 = vmatpush1.msra.mxu0 0.0
    %121 = vmatprep.subr.mxu0 0.0
    %122 = vmatpush1.msra.mxu0 0.0
    %123 = vmatprep.subr.mxu0 0.0
    %124 = vmatpush1.msra.mxu0 0.0
    %125 = vmatprep.subr.mxu0 0.0
    %126 = vmatpush1.msra.mxu0 0.0
    %127 = vmatprep.subr.mxu0 0.0
    %128 = vmatpush1.msra.mxu0 0.0
    %129 = vmatprep.subr.mxu0 0.0
    %130 = vmatpush1.msra.mxu0 0.0
    %131 = vmatprep.subr.mxu0 0.0
    %132 = vmatpush1.msra.mxu0 0.0
    %133 = vmatprep.subr.mxu0 0.0
    %134 = vmatpush1.msra.mxu0 0.0
    %135 = vmatprep.subr.mxu0 0.0
    %136 = vmatpush1.msra.mxu0 0.0
    %137 = vmatprep.subr.mxu0 0.0
    %138 = vmatpush1.msra.mxu0 0.0
    %139 = vmatprep.subr.mxu0 0.0
    %140 = vmatpush1.msra.mxu0 0.0
    %141 = vmatprep.mubr.f32.mxu0 0.0
    %142 = vmatmul.mubr.f32.gmra.mrb[0].mxu0 %v75
    %v143 = vpop.f32.mrb[0].mxu0
    %v144 = vadd.f32 %v71, %v143
    %v145 = vpop.f32.mrb[0].mxu0
    %146 = vdwg.mxu0
    %v147 = vtanh.pop %v144
    %v148 = vld [vmem:[#allocation7] sm:$0xff]
    %v149 = vld [vmem:[#allocation7 + $0x8] sm:$0xff]
    %v150 = vld [vmem:[#allocation7 + $0x10] sm:$0xff]
    %v151 = vld [vmem:[#allocation7 + $0x18] sm:$0xff]
    %v152 = vld [vmem:[#allocation7 + $0x20] sm:$0xff]
    %v153 = vld [vmem:[#allocation7 + $0x28] sm:$0xff]
    %v154 = vld [vmem:[#allocation7 + $0x30] sm:$0xff]
    %v155 = vld [vmem:[#allocation7 + $0x38] sm:$0xff]
    %v157 = vsel %vm73, %v147, 0
    %159 = vmatprep.subr.mxu0 0.0
    %160 = vmatpush1.msra.mxu0 %v148
    %161 = vmatprep.subr.mxu0 0.0
    %162 = vmatpush1.msra.mxu0 %v149
    %163 = vmatprep.subr.mxu0 0.0
    %164 = vmatpush1.msra.mxu0 %v150
    %165 = vmatprep.subr.mxu0 0.0
    %166 = vmatpush1.msra.mxu0 %v151
    %167 = vmatprep.subr.mxu0 0.0
    %168 = vmatpush1.msra.mxu0 %v152
    %169 = vmatprep.subr.mxu0 0.0
    %170 = vmatpush1.msra.mxu0 %v153
    %171 = vmatprep.subr.mxu0 0.0
    %172 = vmatpush1.msra.mxu0 %v154
    %173 = vmatprep.subr.mxu0 0.0
    %174 = vmatpush1.msra.mxu0 %v155
    %175 = vmatprep.subr.mxu0 0.0
    %176 = vmatpush1.msra.mxu0 0.0
    %177 = vmatprep.subr.mxu0 0.0
    %178 = vmatpush1.msra.mxu0 0.0
    %179 = vmatprep.subr.mxu0 0.0
    %180 = vmatpush1.msra.mxu0 0.0
    %181 = vmatprep.subr.mxu0 0.0
    %182 = vmatpush1.msra.mxu0 0.0
    %183 = vmatprep.subr.mxu0 0.0
    %184 = vmatpush1.msra.mxu0 0.0
    %185 = vmatprep.subr.mxu0 0.0
    %186 = vmatpush1.msra.mxu0 0.0
    %187 = vmatprep.subr.mxu0 0.0
    %188 = vmatpush1.msra.mxu0 0.0
    %189 = vmatprep.subr.mxu0 0.0
    %190 = vmatpush1.msra.mxu0 0.0
    %191 = vmatprep.subr.mxu0 0.0
    %192 = vmatpush1.msra.mxu0 0.0
    %193 = vmatprep.subr.mxu0 0.0
    %194 = vmatpush1.msra.mxu0 0.0
    %195 = vmatprep.subr.mxu0 0.0
    %196 = vmatpush1.msra.mxu0 0.0
    %197 = vmatprep.subr.mxu0 0.0
    %198 = vmatpush1.msra.mxu0 0.0
    %199 = vmatprep.subr.mxu0 0.0
    %200 = vmatpush1.msra.mxu0 0.0
    %201 = vmatprep.subr.mxu0 0.0
    %202 = vmatpush1.msra.mxu0 0.0
    %203 = vmatprep.subr.mxu0 0.0
    %204 = vmatpush1.msra.mxu0 0.0
    %205 = vmatprep.subr.mxu0 0.0
    %206 = vmatpush1.msra.mxu0 0.0
    %207 = vmatprep.subr.mxu0 0.0
    %208 = vmatpush1.msra.mxu0 0.0
    %209 = vmatprep.subr.mxu0 0.0
    %210 = vmatpush1.msra.mxu0 0.0
    %211 = vmatprep.subr.mxu0 0.0
    %212 = vmatpush1.msra.mxu0 0.0
    %213 = vmatprep.subr.mxu0 0.0
    %214 = vmatpush1.msra.mxu0 0.0
    %215 = vmatprep.subr.mxu0 0.0
    %216 = vmatpush1.msra.mxu0 0.0
    %217 = vmatprep.subr.mxu0 0.0
    %218 = vmatpush1.msra.mxu0 0.0
    %219 = vmatprep.subr.mxu0 0.0
    %220 = vmatpush1.msra.mxu0 0.0
    %221 = vmatprep.subr.mxu0 0.0
    %222 = vmatpush1.msra.mxu0 0.0
    %223 = vmatprep.mubr.f32.mxu0 0.0
    %224 = vmatmul.mubr.f32.gmra.mrb[0].mxu0 %v157
    %v225 = vpop.f32.mrb[0].mxu0
    %v226 = vadd.f32 0.0, %v225
    %v227 = vpop.f32.mrb[0].mxu0
    %228 = vdwg.mxu0
    %229 = vst [vmem:[#allocation8] sm:$0xff] %v226
    // Predicated region
    $region30: #{tpu_custom_call.1} parent=1 // pred_check
      _
    $region31: #{tpu_custom_call.1} parent=1 // pred_check_branch
      %231 = sbr.rel (0) target = $region33
    $region32: #{tpu_custom_call.1} parent=1 // pred_region
      %s233 = ssub.s32 128, 128
      %234 = vsyncadd [#allocation4], %s233
      %s236 = sshll.u32 [#allocation8], 4
      %s237 = int_to_ptr.vmem [resolvable:$true] %s236
      %239 = dma.vmem_to_hbm [thread:$0]  %s237, 128, %s4, [#allocation4]
    $region33: #{tpu_custom_call.1} parent=1 // pred_fallthru
      _
    // Predicated region
    $region34: #{tpu_custom_call.1} parent=1 // pred_check
      _
    $region35: #{tpu_custom_call.1} parent=1 // pred_check_branch
      %241 = sbr.rel (0) target = $region37
    $region36: #{tpu_custom_call.1} parent=1 // pred_region
      %242 = dma.done [#allocation4], 128
    $region37: #{tpu_custom_call.1} parent=1 // pred_fallthru
      _
    %243 = vsyncpa [#allocation3], 1
    %244 = vsyncpa [#allocation6], 1
    %245 = vsyncpa [#allocation4], 1

</llo_original>
